<compile_context>
chip_gen: v7x
topology: tpu7x:2x2x1
jax: 0.10.0
libtpu: 0.0.40
codegen_flags: <defaults>
</compile_context>

<pallas_src>
import functools

import jax
import jax.numpy as jnp
from jax.experimental import pallas as pl
from jax.experimental.pallas import tpu as pltpu


def _round_up(v, m):
    return ((v + m - 1) // m) * m


def _wnorm_kernel(eps2_ref, x_ref, sum_ref, *cnt_refs, norm, count_nan,
                  ragged, last_valid, tiles_per_split, num_lane_tiles, n_acc):
    t = pl.program_id(2)
    cnt_ref = cnt_refs[0] if count_nan else None

    @pl.when(t == 0)
    def _():
        sum_ref[...] = jnp.zeros(sum_ref.shape, sum_ref.dtype)
        if count_nan:
            cnt_ref[...] = jnp.zeros(cnt_ref.shape, cnt_ref.dtype)

    tr, tl = x_ref.shape
    nch = tl // 128
    eps2 = eps2_ref[0] if norm != "l2" else None

    def accum(masked):
        parts_s = [None] * n_acc
        parts_c = [None] * n_acc
        lane = None
        if masked:
            lane = jax.lax.broadcasted_iota(jnp.int32, (tr, 128), 1)
        for j in range(nch):
            if masked and j * 128 >= last_valid:
                continue  # chunk entirely past the ragged end of the tensor
            xj = x_ref[:, j * 128:(j + 1) * 128].astype(jnp.float32)
            if norm == "l2":
                v = xj * xj
            elif norm == "l1":
                v = jnp.sqrt(eps2 + xj * xj)
            else:  # "lorenz": log(1 + eps^2 * x^2)
                v = jnp.log(1.0 + eps2 * (xj * xj))

            m = None
            if count_nan:
                m = jnp.logical_not(jnp.isnan(xj))
            if masked:
                valid = lane < (last_valid - j * 128)
                m = valid if m is None else jnp.logical_and(m, valid)
            if m is not None:
                v = jnp.where(m, v, 0.0)

            a = j % n_acc
            parts_s[a] = v if parts_s[a] is None else parts_s[a] + v
            if count_nan:
                mi = m.astype(jnp.int32)
                parts_c[a] = mi if parts_c[a] is None else parts_c[a] + mi

        s_tot = None
        for p in parts_s:
            if p is not None:
                s_tot = p if s_tot is None else s_tot + p
        sum_ref[0, :, :] += s_tot
        if count_nan:
            c_tot = None
            for p in parts_c:
                if p is not None:
                    c_tot = p if c_tot is None else c_tot + p
            cnt_ref[0, :, :] += c_tot

    if ragged:
        g = pl.program_id(1) * tiles_per_split + t   # global lane-tile index
        is_last = g == (num_lane_tiles - 1)

        @pl.when(jnp.logical_not(is_last))
        def _():
            accum(masked=False)

        @pl.when(is_last)
        def _():
            accum(masked=True)
    else:
        accum(masked=False)


@functools.partial(jax.jit,
                   static_argnames=("norm", "assume_no_nan", "row_tile", "lane_tile"))
def weighted_norm(x, w, eps=0.0, *, norm="l2", assume_no_nan=False,
                  row_tile=256, lane_tile=4096):
    """Weighted nansum norm of x (N, C, H, W) with per-channel weights w (C,)."""
    assert norm in ("l2", "l1", "lorenz")
    assert lane_tile % 128 == 0 and row_tile % 8 == 0
    n, c, h, wd = x.shape
    hw = h * wd
    r0 = n * c

    # Fill the 8 f32 sublanes when N*C < 8 by splitting each (n, c) row into k
    # contiguous sub-rows (still a free contiguous reshape); folded back later.
    k = 1
    if r0 < 8:
        want = -(-8 // r0)
        for cand in range(want, min(hw, 8 * want) + 1):
            if hw % cand == 0:
                k = cand
                break
        else:
            for cand in range(want - 1, 0, -1):
                if hw % cand == 0:
                    k = cand
                    break
    rows = r0 * k
    hw_eff = hw // k
    x_v = x.reshape(rows, hw_eff)                         # free 2D view

    # Lane / row tiling: aim for ~1 MiB, lane-dense, multi-row input blocks.
    tl = min(lane_tile, _round_up(hw_eff, 128))
    target_bytes = 1 << 20
    want_rows = max(8, min(row_tile, (target_bytes // (tl * 4)) // 8 * 8))
    tr = rows if rows < 8 else min(want_rows, (rows // 8) * 8)

    num_row_blocks = pl.cdiv(rows, tr)
    num_lane_tiles = pl.cdiv(hw_eff, tl)
    ragged = (hw_eff % tl) != 0
    last_valid = hw_eff - (num_lane_tiles - 1) * tl       # valid lanes of last tile

    # 2-way parallel split of the reduction axis so both v7x TensorCores get
    # work even with a single row block (harmless on single-TC v5e/v6e).
    num_splits = 2 if (num_row_blocks == 1 and num_lane_tiles >= 4
                       and num_lane_tiles % 2 == 0) else 1
    tiles_per_split = num_lane_tiles // num_splits

    count_nan = not assume_no_nan
    nch = tl // 128
    ilp_cap = max(1, 256 // max(tr, 8))                   # keep accumulators in vregs
    n_acc = max(1, min(2 if count_nan else 4, nch, ilp_cap))

    eps_f = jnp.asarray(eps, jnp.float32)
    eps2 = (eps_f * eps_f).reshape(1)                     # host-side eps^2

    total = n * c * hw
    cost = pl.CostEstimate(
        flops=6 * total,
        transcendentals=0 if norm == "l2" else total,
        bytes_accessed=4 * total,
    )

    out_shape = [jax.ShapeDtypeStruct((num_splits, rows, 128), jnp.float32)]
    out_specs = [pl.BlockSpec((1, tr, 128), lambda rb, s, t: (s, rb, 0))]
    if count_nan:
        out_shape.append(jax.ShapeDtypeStruct((num_splits, rows, 128), jnp.int32))
        out_specs.append(pl.BlockSpec((1, tr, 128), lambda rb, s, t: (s, rb, 0)))

    kernel = functools.partial(
        _wnorm_kernel, norm=norm, count_nan=count_nan, ragged=ragged,
        last_valid=last_valid, tiles_per_split=tiles_per_split,
        num_lane_tiles=num_lane_tiles, n_acc=n_acc)

    outs = pl.pallas_call(
        kernel,
        out_shape=tuple(out_shape),
        grid=(num_row_blocks, num_splits, tiles_per_split),
        in_specs=[
            pl.BlockSpec(memory_space=pltpu.SMEM),                        # eps^2 (1,)
            pl.BlockSpec((tr, tl),
                         lambda rb, s, t: (rb, s * tiles_per_split + t)),  # x tile
        ],
        out_specs=tuple(out_specs),
        compiler_params=pltpu.CompilerParams(
            dimension_semantics=("parallel", "parallel", "arbitrary"),
            vmem_limit_bytes=32 * 1024 * 1024,
        ),
        cost_estimate=cost,
    )(eps2, x_v)

    # Tiny JAX epilogue: fold lanes / splits / sub-rows / batch, weighted
    # nansum over channels, normalize by (non-NaN count / C).
    sums = outs[0]
    per_row = jnp.sum(sums, axis=(0, 2))                   # (rows,)
    per_chan = per_row.reshape(n, c, k).sum(axis=(0, 2))   # (C,)
    w_f = jnp.asarray(w, jnp.float32).reshape(c)
    prod = per_chan * w_f
    prod = jnp.where(jnp.isnan(prod), 0.0, prod)           # torch.nansum(loss * w)
    total_loss = jnp.sum(prod)
    if count_nan:
        per_row_cnt = jnp.sum(outs[1], axis=(0, 2))        # exact int32 per row
        count = jnp.sum(per_row_cnt.astype(jnp.float32))   # f32 total (no i32 overflow)
    else:
        count = jnp.float32(total)                         # caller guarantees no NaN
    denom = count / jnp.float32(c)
    return total_loss / denom


def model_var_cost(dx, dy, *, alpha_obs, alpha_reg, w_obs, w_reg, eps_obs, eps_reg,
                   norm_obs="l2", norm_prior="l2", assume_prior_no_nan=False):
    """Model_Var_Cost.forward for dim_obs == 1 (default Solver_Grad_4DVarNN
    wiring, m_NormObs = m_NormPhi = None -> weighted L2 norms).
    Set assume_prior_no_nan=True only when the caller guarantees dx is NaN-free
    (true for dx = x - phi_r(x) in the solver)."""
    loss = alpha_reg ** 2 * weighted_norm(dx, w_reg ** 2, eps_reg, norm=norm_prior,
                                          assume_no_nan=assume_prior_no_nan)
    loss = loss + alpha_obs ** 2 * weighted_norm(dy, w_obs ** 2, eps_obs, norm=norm_obs)
    return loss


def _ref_weighted_norm(x, w, eps, norm):
    if norm == "l2":
        v = x ** 2
    elif norm == "l1":
        v = jnp.sqrt(eps ** 2 + x ** 2)
    else:
        v = jnp.log(1.0 + eps ** 2 * x ** 2)
    l = jnp.nansum(v, axis=3)
    l = jnp.nansum(l, axis=2)
    l = jnp.nansum(l, axis=0)
    l = jnp.nansum(l * w)
    return l / (jnp.sum(~jnp.isnan(x)).astype(jnp.float32) / x.shape[1])


if __name__ == "__main__":
    key = jax.random.PRNGKey(0)
    k1, k2, k3, k4 = jax.random.split(key, 4)

    N, C, H, W = 2, 4, 16, 16
    dx = jax.random.normal(k1, (N, C, H, W), dtype=jnp.float32) * 2.0
    dy = jax.random.normal(k2, (N, C, H, W), dtype=jnp.float32) * 3.0
    # Obs residuals carry NaNs where observations are missing -> exercises the
    # nansum / non-NaN-count semantics.
    nan_mask = jax.random.bernoulli(k3, p=0.05, shape=(N, C, H, W))
    dy = jnp.where(nan_mask, jnp.nan, dy)
    wv = jax.random.uniform(k4, (C,), dtype=jnp.float32) + 0.5
    eps = jnp.float32(0.1)

    # Weighted-norm kernels (L2 / L1 from the module, plus the Lorenz variant).
    for norm in ("l2", "l1", "lorenz"):
        out = weighted_norm(dy, wv, eps, norm=norm)
        jax.block_until_ready(out)
        ref = _ref_weighted_norm(dy, wv, eps, norm)
        assert jnp.allclose(out, ref, rtol=1e-5, atol=1e-4), (norm, out, ref)

    # NaN-free fast path (assume_no_nan) on the prior residual.
    for norm in ("l2", "l1"):
        out = weighted_norm(dx, wv, eps, norm=norm, assume_no_nan=True)
        jax.block_until_ready(out)
        ref = _ref_weighted_norm(dx, wv, eps, norm)
        assert jnp.allclose(out, ref, rtol=1e-5, atol=1e-4), (norm, out, ref)

    # Ragged spatial extent (exercises the last-tile lane mask).
    kr1, kr2 = jax.random.split(k3, 2)
    xr = jax.random.normal(kr1, (2, 4, 5, 7), dtype=jnp.float32)
    xr = jnp.where(jax.random.bernoulli(kr2, p=0.1, shape=xr.shape), jnp.nan, xr)
    for norm in ("l2", "l1"):
        out = weighted_norm(xr, wv, eps, norm=norm)
        jax.block_until_ready(out)
        ref = _ref_weighted_norm(xr, wv, eps, norm)
        assert jnp.allclose(out, ref, rtol=1e-5, atol=1e-4), (norm, out, ref)

    # Few rows (N*C < 8) -> sublane-fill via the k-split path.
    xs = jax.random.normal(k4, (1, 2, 16, 16), dtype=jnp.float32)
    xs = jnp.where(jax.random.bernoulli(k1, p=0.1, shape=xs.shape), jnp.nan, xs)
    ws = jnp.array([0.7, 1.3], jnp.float32)
    out = weighted_norm(xs, ws, eps, norm="l2")
    jax.block_until_ready(out)
    ref = _ref_weighted_norm(xs, ws, eps, "l2")
    assert jnp.allclose(out, ref, rtol=1e-5, atol=1e-4), (out, ref)

    # Model_Var_Cost.forward (dim_obs == 1, default weighted-L2 norms).
    alpha_obs = jnp.float32(1.0)
    alpha_reg = jnp.float32(1.0)
    w_obs = jnp.ones((C,), jnp.float32)
    w_reg = jnp.ones((C,), jnp.float32)
    vc = model_var_cost(dx, dy, alpha_obs=alpha_obs, alpha_reg=alpha_reg,
                        w_obs=w_obs, w_reg=w_reg, eps_obs=eps, eps_reg=eps,
                        assume_prior_no_nan=True)
    jax.block_until_ready(vc)
    vc_ref = (alpha_reg ** 2 * _ref_weighted_norm(dx, w_reg ** 2, eps, "l2")
              + alpha_obs ** 2 * _ref_weighted_norm(dy, w_obs ** 2, eps, "l2"))
    assert jnp.allclose(vc, vc_ref, rtol=1e-5, atol=1e-4), (vc, vc_ref)

    print("KERNEL_OK")
</pallas_src>

<mosaic_0001>
module attributes {stable_mosaic.version = 11 : i64} {
  func.func @_wnorm_kernel(%arg0: i32, %arg1: i32, %arg2: i32, %arg3: memref<1xf32, #tpu.memory_space<smem>>, %arg4: memref<8x256xf32, #tpu.memory_space<vmem>>, %arg5: memref<1x8x128xf32, #tpu.memory_space<vmem>>, %arg6: memref<1x8x128xi32, #tpu.memory_space<vmem>>) attributes {dimension_semantics = [#tpu.dimension_semantics<parallel>, #tpu.dimension_semantics<parallel>, #tpu.dimension_semantics<arbitrary>], iteration_bounds = array<i64: 1, 1, 1>, scalar_prefetch = 0 : i64, scratch_operands = 0 : i64, tpu.core_type = #tpu.core_type<tc>, window_params = [{transform_indices = @transform_0, window_bounds = array<i64: 1>}, {transform_indices = @transform_1, window_bounds = array<i64: 8, 256>}, {transform_indices = @transform_2, window_bounds = array<i64: 1, 8, 128>}, {transform_indices = @transform_3, window_bounds = array<i64: 1, 8, 128>}]} {
    %c0_i32 = arith.constant 0 : i32
    %0 = arith.cmpi eq, %arg2, %c0_i32 : i32
    %1 = arith.extui %0 : i1 to i32
    %c0_i32_0 = arith.constant 0 : i32
    %2 = arith.cmpi ne, %1, %c0_i32_0 : i32
    scf.if %2 {
      %cst_18 = arith.constant 0.000000e+00 : f32
      %31 = vector.broadcast %cst_18 : f32 to vector<1x8x128xf32>
      %c0_19 = arith.constant 0 : index
      %c0_20 = arith.constant 0 : index
      %c0_21 = arith.constant 0 : index
      %32 = vector.load %arg5[%c0_19, %c0_20, %c0_21] : memref<1x8x128xf32, #tpu.memory_space<vmem>>, vector<1x8x128xf32>
      tpu.vector_store %arg5[%c0_19, %c0_20, %c0_21], %31 {strides = array<i32>} : memref<1x8x128xf32, #tpu.memory_space<vmem>>, vector<1x8x128xf32>,
      %c0_i32_22 = arith.constant 0 : i32
      %33 = vector.broadcast %c0_i32_22 : i32 to vector<1x8x128xi32>
      %c0_23 = arith.constant 0 : index
      %c0_24 = arith.constant 0 : index
      %c0_25 = arith.constant 0 : index
      %34 = vector.load %arg6[%c0_23, %c0_24, %c0_25] : memref<1x8x128xi32, #tpu.memory_space<vmem>>, vector<1x8x128xi32>
      tpu.vector_store %arg6[%c0_23, %c0_24, %c0_25], %33 {strides = array<i32>} : memref<1x8x128xi32, #tpu.memory_space<vmem>>, vector<1x8x128xi32>,
    } else {
    }
    %c0 = arith.constant 0 : index
    %c0_1 = arith.constant 0 : index
    %3 = vector.load %arg4[%c0, %c0_1] : memref<8x256xf32, #tpu.memory_space<vmem>>, vector<8x128xf32>
    %4 = arith.mulf %3, %3 : vector<8x128xf32>
    %5 = arith.cmpf one, %3, %3 : vector<8x128xf32>
    %cst = arith.constant dense<true> : vector<8x128xi1>
    %6 = arith.xori %5, %cst : vector<8x128xi1>
    %cst_2 = arith.constant 0.000000e+00 : f32
    %7 = vector.broadcast %cst_2 : f32 to vector<8x128xf32>
    %8 = arith.select %6, %4, %7 : vector<8x128xi1>, vector<8x128xf32>
    %9 = arith.extui %6 : vector<8x128xi1> to vector<8x128xi32>
    %c0_3 = arith.constant 0 : index
    %c128 = arith.constant 128 : index
    %10 = vector.load %arg4[%c0_3, %c128] : memref<8x256xf32, #tpu.memory_space<vmem>>, vector<8x128xf32>
    %11 = arith.mulf %10, %10 : vector<8x128xf32>
    %12 = arith.cmpf one, %10, %10 : vector<8x128xf32>
    %cst_4 = arith.constant dense<true> : vector<8x128xi1>
    %13 = arith.xori %12, %cst_4 : vector<8x128xi1>
    %cst_5 = arith.constant 0.000000e+00 : f32
    %14 = vector.broadcast %cst_5 : f32 to vector<8x128xf32>
    %15 = arith.select %13, %11, %14 : vector<8x128xi1>, vector<8x128xf32>
    %16 = arith.extui %13 : vector<8x128xi1> to vector<8x128xi32>
    %17 = arith.addf %8, %15 : vector<8x128xf32>
    %c0_6 = arith.constant 0 : index
    %c0_7 = arith.constant 0 : index
    %c0_8 = arith.constant 0 : index
    %18 = vector.load %arg5[%c0_6, %c0_7, %c0_8] : memref<1x8x128xf32, #tpu.memory_space<vmem>>, vector<1x8x128xf32>
    %19 = vector.shape_cast %18 : vector<1x8x128xf32> to vector<8x128xf32>
    %20 = arith.addf %19, %17 : vector<8x128xf32>
    %c0_9 = arith.constant 0 : index
    %c0_10 = arith.constant 0 : index
    %c0_11 = arith.constant 0 : index
    %21 = vector.load %arg5[%c0_9, %c0_10, %c0_11] : memref<1x8x128xf32, #tpu.memory_space<vmem>>, vector<1x8x128xf32>
    %22 = vector.shape_cast %21 : vector<1x8x128xf32> to vector<8x128xf32>
    %23 = vector.shape_cast %20 : vector<8x128xf32> to vector<1x8x128xf32>
    tpu.vector_store %arg5[%c0_9, %c0_10, %c0_11], %23 {strides = array<i32>} : memref<1x8x128xf32, #tpu.memory_space<vmem>>, vector<1x8x128xf32>,
    %24 = arith.addi %9, %16 : vector<8x128xi32>
    %c0_12 = arith.constant 0 : index
    %c0_13 = arith.constant 0 : index
    %c0_14 = arith.constant 0 : index
    %25 = vector.load %arg6[%c0_12, %c0_13, %c0_14] : memref<1x8x128xi32, #tpu.memory_space<vmem>>, vector<1x8x128xi32>
    %26 = vector.shape_cast %25 : vector<1x8x128xi32> to vector<8x128xi32>
    %27 = arith.addi %26, %24 : vector<8x128xi32>
    %c0_15 = arith.constant 0 : index
    %c0_16 = arith.constant 0 : index
    %c0_17 = arith.constant 0 : index
    %28 = vector.load %arg6[%c0_15, %c0_16, %c0_17] : memref<1x8x128xi32, #tpu.memory_space<vmem>>, vector<1x8x128xi32>
    %29 = vector.shape_cast %28 : vector<1x8x128xi32> to vector<8x128xi32>
    %30 = vector.shape_cast %27 : vector<8x128xi32> to vector<1x8x128xi32>
    tpu.vector_store %arg6[%c0_15, %c0_16, %c0_17], %30 {strides = array<i32>} : memref<1x8x128xi32, #tpu.memory_space<vmem>>, vector<1x8x128xi32>,
    return
  }
  func.func @transform_0(%arg0: i32, %arg1: i32, %arg2: i32) -> i32 {
    %c0_i32 = arith.constant 0 : i32
    %c0_i32_0 = arith.constant 0 : i32
    return %c0_i32 : i32
  }
  func.func @transform_1(%arg0: i32, %arg1: i32, %arg2: i32) -> (i32, i32) {
    %c1_i32 = arith.constant 1 : i32
    %0 = arith.muli %arg1, %c1_i32 : i32
    %1 = arith.addi %0, %arg2 : i32
    %c0_i32 = arith.constant 0 : i32
    return %arg0, %1 : i32, i32
  }
  func.func @transform_2(%arg0: i32, %arg1: i32, %arg2: i32) -> (i32, i32, i32) {
    %c0_i32 = arith.constant 0 : i32
    %c0_i32_0 = arith.constant 0 : i32
    return %arg1, %arg0, %c0_i32 : i32, i32, i32
  }
  func.func @transform_3(%arg0: i32, %arg1: i32, %arg2: i32) -> (i32, i32, i32) {
    %c0_i32 = arith.constant 0 : i32
    %c0_i32_0 = arith.constant 0 : i32
    return %arg1, %arg0, %c0_i32 : i32, i32, i32
  }
}

</mosaic_0001>

<llo_original>
// kernel: weighted_norm.1
$region0: #{weighted_norm.1}
  #allocation0 [shape = 'u32[]', space=smem, size = 0x4, offset = 0x4, fixed_abs, tag = 'smem constant byte address 0x4 - core index']
  #allocation1 [shape = 'u32[144,128]{1,0:T(1,128)}', space=vmem, size = 0x12000, scoped, tag = 'internal scratch']
  #allocation2 [shape = 'f32[1]{0:T(128)S(6)}', space=smem, size = 0x200, scoped, tag = 'scoped memory for weighted_norm.1']
  %s0 = inlined_call_operand.<no memory space> [shape: f32[1], index: 0, kind: input, shape index: {}]
  %s1 = inlined_call_operand.vmem [shape: f32[8,256], index: 1, kind: input, shape index: {}]
  %s2 = inlined_call_operand.vmem [shape: f32[1,8,128], index: 2, kind: output, shape index: {0}]
  %s3 = inlined_call_operand.vmem [shape: s32[1,8,128], index: 3, kind: output, shape index: {1}]
  %4 = xla_tuple %s2, %s3
  %s5 = sld [smem:[#allocation0]]
  $region30: #{weighted_norm.1} parent=0
    _
  %s7 = ssub.s32 1, %s5
  %s8 = scalar_select 0, %s7, %s5
  %9 = sst [smem:[#allocation2]] %s0
  // Predicated region
  $region2: #{weighted_norm.1} parent=0 // pred_check
    _
  $region3: #{weighted_norm.1} parent=0 // pred_check_branch
    %11 = sbr.rel (0) target = $region5
  $region4: #{weighted_norm.1} parent=0 // pred_region
    _
  $region5: #{weighted_norm.1} parent=0 // pred_fallthru
    _
  // Predicated region
  $region6: #{weighted_norm.1} parent=0 // pred_check
    _
  $region7: #{weighted_norm.1} parent=0 // pred_check_branch
    %13 = sbr.rel (0) target = $region9
  $region8: #{weighted_norm.1} parent=0 // pred_region
    %s14 = sadd.s32 0, 0
    %s15 = smul.u32 2, %s14
    %p16 = scmp.lt.s32.totalorder %s15, 1
    %s17 = scalar_select %p16, %s15, 1
    %s18 = smul.addr %s17, 8
    %s19 = scalar_lea.vmem %s1, %s18
    %s20 = sadd.s32 0, 0
    %s21 = smul.u32 2, %s20
  $region9: #{weighted_norm.1} parent=0 // pred_fallthru
    _
  %s22 = sadd.s32 0, 0
  %s23 = smul.u32 2, %s22
  %p24 = scmp.lt.s32.totalorder %s23, 1
  %s25 = scalar_select %p24, %s23, 1
  %s26 = smul.addr %s25, 8
  %s27 = scalar_lea.vmem %s1, %s26
  %s28 = sadd.s32 0, 0
  %s29 = smul.u32 2, %s28
  %p30 = scmp.lt.s32.totalorder %s29, 1
  %s31 = scalar_select %p30, %s29, 1
  %s32 = smul.addr %s31, 8
  %s33 = scalar_lea.vmem %s1, %s32
  %s34 = sadd.s32 0, 0
  %s35 = smul.u32 2, %s34
  %p36 = scmp.eq.s32.totalorder 0, 0
  // Predicated region
  $region10: #{weighted_norm.1} parent=0 // pred_check
    %p37 = pneg %p36
  $region11: #{weighted_norm.1} parent=0 // pred_check_branch
    %39 = sbr.rel (%p37) target = $region13
  $region12: #{weighted_norm.1} parent=0 // pred_region
    %40 = vst [vmem:[%s2] sm:$0xff] 0.0
    %41 = vst [vmem:[%s3] sm:$0xff] 0
  $region13: #{weighted_norm.1} parent=0 // pred_fallthru
    _
  %v42 = vld [vmem:[%s33] sm:$0xff]
  %v43 = vmul.f32 %v42, %v42
  %vm44 = vcmp.ne.f32.partialorder %v42, %v42
  %vm45 = vmxor %vm44, 1
  %v46 = vsel %vm45, %v43, 0.0
  %v47 = vsel %vm45, 1, 0
  %v48 = vld [vmem:[%s33 + $0x8] sm:$0xff]
  %v49 = vmul.f32 %v48, %v48
  %vm50 = vcmp.ne.f32.partialorder %v48, %v48
  %vm51 = vmxor %vm50, 1
  %v52 = vsel %vm51, %v49, 0.0
  %v53 = vsel %vm51, 1, 0
  %v54 = vadd.f32 %v46, %v52
  %v55 = vld [vmem:[%s2] sm:$0xff]
  %v56 = vadd.f32 %v55, %v54
  %57 = vst [vmem:[%s2] sm:$0xff] %v56
  %v58 = vadd.s32 %v47, %v53
  %v59 = vld [vmem:[%s3] sm:$0xff]
  %v60 = vadd.s32 %v59, %v58
  %61 = vst [vmem:[%s3] sm:$0xff] %v60
  // Predicated region
  $region14: #{weighted_norm.1} parent=0 // pred_check
    _
  $region15: #{weighted_norm.1} parent=0 // pred_check_branch
    %63 = sbr.rel (0) target = $region17
  $region16: #{weighted_norm.1} parent=0 // pred_region
    _
  $region17: #{weighted_norm.1} parent=0 // pred_fallthru
    _
  // Predicated region
  $region18: #{weighted_norm.1} parent=0 // pred_check
    _
  $region19: #{weighted_norm.1} parent=0 // pred_check_branch
    %65 = sbr.rel (0) target = $region21
  $region20: #{weighted_norm.1} parent=0 // pred_region
    _
  $region21: #{weighted_norm.1} parent=0 // pred_fallthru
    _
  // Predicated region
  $region22: #{weighted_norm.1} parent=0 // pred_check
    _
  $region23: #{weighted_norm.1} parent=0 // pred_check_branch
    %67 = sbr.rel (0) target = $region25
  $region24: #{weighted_norm.1} parent=0 // pred_region
    _
  $region25: #{weighted_norm.1} parent=0 // pred_fallthru
    _
  // Predicated region
  $region26: #{weighted_norm.1} parent=0 // pred_check
    _
  $region27: #{weighted_norm.1} parent=0 // pred_check_branch
    %69 = sbr.rel (0) target = $region29
  $region28: #{weighted_norm.1} parent=0 // pred_region
    _
  $region29: #{weighted_norm.1} parent=0 // pred_fallthru
    _

</llo_original>
